<compile_context>
chip_gen: v7x
topology: tpu7x:2x2x1
jax: 0.10.0
libtpu: 0.0.40
codegen_flags: <defaults>
</compile_context>

<pallas_src>
import functools

import jax
import jax.numpy as jnp
from jax.experimental import pallas as pl
from jax.experimental.pallas import tpu as pltpu

SLOPE = 0.2                        # LeakyReLU negative slope ('lrelu')
EXPANSION = 4                      # Bottleneck expansion
_LANE = 128
_VMEM_LIMIT = 48 * 1024 * 1024     # explicit scoped-VMEM budget (safe on v5e..v7x)


def _round_up(x, m):
    return ((x + m - 1) // m) * m


def _cpad(c):
    """Physical channel count: pad >=64-channel tensors to a lane multiple."""
    return _round_up(c, _LANE) if c >= 64 else c


def _largest_divisor(n, cands):
    for c in cands:
        if n % c == 0:
            return c
    return None


def _choose_tiles(M, K, N):
    """Shape-adaptive MXU tiles (full-dim blocks are exempt from (8,128))."""
    TM = 512 if M >= 512 else max(_round_up(M, 8), 8)
    Mp = _round_up(M, TM)
    # K: single full-K step for moderate K (fewer grid steps, long MXU bursts).
    if K <= 2304:
        TK, Kp = K, K
    else:
        Kp = _round_up(K, 128)
        TK = _largest_divisor(
            Kp, (2304, 2048, 1536, 1152, 1024, 768, 512, 384, 256, 128))
    # N: lane-dense tiles.
    if N % 128 == 0:
        TN, Np = _largest_divisor(N, (512, 256, 128)), N
    elif N <= 2048:
        TN, Np = N, N
    else:
        Np = _round_up(N, 128)
        TN = _largest_divisor(Np, (512, 256, 128))
    # v7x: keep >=2 blocks along a parallel axis so both TensorCores get work.
    if Mp // TM == 1 and Np // TN == 1:
        if TN % 256 == 0:
            TN //= 2
        elif TM % 16 == 0:
            TM //= 2
    return TM, TK, TN, Mp, Kp, Np


# ----------------------------------------------------------------------------
# Kernel 1: tiled bf16 GEMM (f32 acc) fused with BN affine + LeakyReLU
# (+ optional residual add).  Bias pre-folded into the BN shift.
# ----------------------------------------------------------------------------
def _gemm_bn_act_kernel(x_ref, w_ref, s_ref, t_ref, o_ref, acc_ref, *, act):
    @pl.when(pl.program_id(2) == 0)
    def _():
        acc_ref[...] = jnp.zeros_like(acc_ref)

    acc_ref[...] += jnp.dot(x_ref[...], w_ref[...],
                            preferred_element_type=jnp.float32)

    @pl.when(pl.program_id(2) == pl.num_programs(2) - 1)
    def _():
        y = acc_ref[...] * s_ref[...] + t_ref[...]
        if act:
            y = jnp.maximum(y, SLOPE * y)
        o_ref[...] = y.astype(o_ref.dtype)


def _gemm_bn_res_act_kernel(x_ref, w_ref, s_ref, t_ref, r_ref, o_ref,
                            acc_ref, *, act):
    @pl.when(pl.program_id(2) == 0)
    def _():
        acc_ref[...] = jnp.zeros_like(acc_ref)

    acc_ref[...] += jnp.dot(x_ref[...], w_ref[...],
                            preferred_element_type=jnp.float32)

    @pl.when(pl.program_id(2) == pl.num_programs(2) - 1)
    def _():
        y = acc_ref[...] * s_ref[...] + t_ref[...]
        y = y + r_ref[...].astype(jnp.float32)          # bf16 residual stream
        if act:
            y = jnp.maximum(y, SLOPE * y)
        o_ref[...] = y.astype(o_ref.dtype)


def _pad2d(a, rows, cols):
    pr, pc = rows - a.shape[0], cols - a.shape[1]
    if pr or pc:
        a = jnp.pad(a, ((0, pr), (0, pc)))
    return a


def _weight_spec(TK, TN, k_steps):
    imap = lambda i, j, k: (k, j)
    if k_steps >= 6 and hasattr(pl, "Buffered"):
        try:   # deeper weight pipeline for long reduction loops
            return pl.BlockSpec((TK, TN), imap, pipeline_mode=pl.Buffered(3))
        except TypeError:
            pass
    return pl.BlockSpec((TK, TN), imap)


def fused_matmul(x, w, scale, shift, residual=None, act=True,
                 out_dtype=jnp.bfloat16):
    """y = act((x @ w) * scale + shift [+ residual]); bf16 in, f32 acc."""
    M, K = x.shape
    K2, N = w.shape
    assert K == K2
    TM, TK, TN, Mp, Kp, Np = _choose_tiles(M, K, N)

    xp = _pad2d(x.astype(jnp.bfloat16), Mp, Kp)
    wp = w.astype(jnp.bfloat16)
    if Kp != K or Np != N:
        wp = _pad2d(wp, Kp, Np)
    sp = scale if scale.shape == (1, Np) else \
        _pad2d(scale.reshape(1, -1).astype(jnp.float32), 1, Np)
    tp = shift if shift.shape == (1, Np) else \
        _pad2d(shift.reshape(1, -1).astype(jnp.float32), 1, Np)

    vec_spec = pl.BlockSpec((1, TN), lambda i, j, k: (0, j))
    in_specs = [pl.BlockSpec((TM, TK), lambda i, j, k: (i, k)),
                _weight_spec(TK, TN, Kp // TK),
                vec_spec, vec_spec]
    args = [xp, wp, sp, tp]
    if residual is not None:
        rp = _pad2d(residual, Mp, Np)
        in_specs.append(pl.BlockSpec((TM, TN), lambda i, j, k: (i, j)))
        args.append(rp)
        kernel = functools.partial(_gemm_bn_res_act_kernel, act=act)
    else:
        kernel = functools.partial(_gemm_bn_act_kernel, act=act)

    out = pl.pallas_call(
        kernel,
        out_shape=jax.ShapeDtypeStruct((Mp, Np), out_dtype),
        grid_spec=pltpu.PrefetchScalarGridSpec(
            num_scalar_prefetch=0,
            grid=(Mp // TM, Np // TN, Kp // TK),
            in_specs=in_specs,
            out_specs=pl.BlockSpec((TM, TN), lambda i, j, k: (i, j)),
            scratch_shapes=[pltpu.VMEM((TM, TN), jnp.float32)],
        ),
        compiler_params=pltpu.CompilerParams(
            dimension_semantics=("parallel", "parallel", "arbitrary"),
            vmem_limit_bytes=_VMEM_LIMIT),
    )(*args)
    if Mp != M or Np != N:
        out = out[:M, :N]
    return out


# ----------------------------------------------------------------------------
# Kernel 2: fused direct conv (im2col done in VMEM, not in HBM).
# Grid = (batch, Cout tiles, Cin tiles); Cin is the reduction axis.
# ----------------------------------------------------------------------------
def _sl(start, size, stride):
    if stride > 1 and size > 1:
        return pl.ds(start, size, stride=stride)
    return pl.ds(start, size)


def _direct_conv_kernel(x_ref, w_ref, s_ref, t_ref, o_ref, acc_ref, *,
                        kh, kw, stride, Ho, Wo, act):
    # x_ref: [Hp, Wp, TC]   w_ref: [kh*kw, TC, TN]   acc_ref: [Ho*Wo, TN]
    @pl.when(pl.program_id(2) == 0)
    def _():
        acc_ref[...] = jnp.zeros_like(acc_ref)

    tc = x_ref.shape[-1]
    partial = None
    for di in range(kh):
        for dj in range(kw):
            win = x_ref[_sl(di, Ho, stride), _sl(dj, Wo, stride), :]
            patch = win.reshape(Ho * Wo, tc)
            contrib = jnp.dot(patch, w_ref[di * kw + dj],
                              preferred_element_type=jnp.float32)
            partial = contrib if partial is None else partial + contrib
    acc_ref[...] += partial

    @pl.when(pl.program_id(2) == pl.num_programs(2) - 1)
    def _():
        y = acc_ref[...] * s_ref[...] + t_ref[...]
        if act:
            y = jnp.maximum(y, SLOPE * y)
        o_ref[...] = y.astype(o_ref.dtype)


def _direct_conv(x, p, stride, pad, act):
    kh, kw, _, _ = p['ksize']
    Cp, Npc = p['cin_phys'], p['cout_phys']
    B, H, W, _ = x.shape
    Hp, Wp = H + 2 * pad, W + 2 * pad
    Ho = (Hp - kh) // stride + 1
    Wo = (Wp - kw) // stride + 1
    M = Ho * Wo

    TC = _largest_divisor(Cp, (512, 256, 128)) or Cp
    TN = _largest_divisor(Npc, (512, 256, 128)) or Npc
    if Cp % TC or Npc % TN:
        raise ValueError("untileable channel counts")
    # VMEM footprint guard (double-buffered in/out + f32 accumulator).
    est = 2 * (Hp * Wp * TC * 2 + kh * kw * TC * TN * 2 + M * TN * 2) + M * TN * 4
    if est > 12 * 1024 * 1024:
        # TODO(synk): tile over output rows (Ho) for large images instead of
        # falling back to the im2col path.
        raise ValueError("direct-conv block too large for VMEM")

    xp = jnp.pad(x, ((0, 0), (pad, pad), (pad, pad), (0, 0))) if pad else x

    kernel = functools.partial(_direct_conv_kernel, kh=kh, kw=kw,
                               stride=stride, Ho=Ho, Wo=Wo, act=act)
    out = pl.pallas_call(
        kernel,
        out_shape=jax.ShapeDtypeStruct((B, M, Npc), jnp.bfloat16),
        grid_spec=pltpu.PrefetchScalarGridSpec(
            num_scalar_prefetch=0,
            grid=(B, Npc // TN, Cp // TC),
            in_specs=[
                pl.BlockSpec((None, Hp, Wp, TC), lambda b, n, c: (b, 0, 0, c)),
                pl.BlockSpec((kh * kw, TC, TN), lambda b, n, c: (0, c, n)),
                pl.BlockSpec((1, TN), lambda b, n, c: (0, n)),
                pl.BlockSpec((1, TN), lambda b, n, c: (0, n)),
            ],
            out_specs=pl.BlockSpec((None, M, TN), lambda b, n, c: (b, 0, n)),
            scratch_shapes=[pltpu.VMEM((M, TN), jnp.float32)],
        ),
        compiler_params=pltpu.CompilerParams(
            dimension_semantics=("parallel", "parallel", "arbitrary"),
            vmem_limit_bytes=_VMEM_LIMIT),
    )(xp, p['wmat'], p['scale'], p['shift'])
    return out.reshape(B, Ho, Wo, Npc)


# ----------------------------------------------------------------------------
# Convolution wrapper: 1x1 fast path / fused direct conv / im2col fallback.
# ----------------------------------------------------------------------------
def _im2col(x, kh, kw, stride, pad):
    if pad:
        x = jnp.pad(x, ((0, 0), (pad, pad), (pad, pad), (0, 0)))
    B, H, W, C = x.shape
    Ho = (H - kh) // stride + 1
    Wo = (W - kw) // stride + 1
    cols = []
    for i in range(kh):
        for j in range(kw):
            cols.append(x[:, i:i + (Ho - 1) * stride + 1:stride,
                          j:j + (Wo - 1) * stride + 1:stride, :])
    patches = jnp.stack(cols, axis=3)            # B,Ho,Wo,kh*kw,C
    return patches.reshape(B * Ho * Wo, kh * kw * C), B, Ho, Wo


def conv2d(x, p, stride, pad, act=True, residual=None):
    kh, kw, _, _ = p['ksize']
    Cp, Npc = p['cin_phys'], p['cout_phys']

    if kh == 1 and kw == 1 and pad == 0:
        xs = x if stride == 1 else x[:, ::stride, ::stride, :]
        B, Ho, Wo, _ = xs.shape
        cols = xs.reshape(B * Ho * Wo, Cp)
        res2 = (residual.reshape(B * Ho * Wo, Npc)
                if residual is not None else None)
        y = fused_matmul(cols, p['wmat'].reshape(Cp, Npc),
                         p['scale'], p['shift'], residual=res2, act=act)
        return y.reshape(B, Ho, Wo, Npc)

    if residual is None and Cp >= 64:
        try:      # fused direct conv (input read once from HBM)
            return _direct_conv(x, p, stride, pad, act)
        except Exception:
            pass  # fall back to im2col + GEMM below

    cols, B, Ho, Wo = _im2col(x, kh, kw, stride, pad)
    res2 = residual.reshape(B * Ho * Wo, Npc) if residual is not None else None
    y = fused_matmul(cols, p['wmat'].reshape(kh * kw * Cp, Npc),
                     p['scale'], p['shift'], residual=res2, act=act)
    return y.reshape(B, Ho, Wo, Npc)


# ----------------------------------------------------------------------------
# Parameter construction (deterministic, in-script).
# ----------------------------------------------------------------------------
def conv_params(key, cin, cout, k, use_bias=True, bn=True, cin_phys=None):
    cin_phys = cin if cin_phys is None else cin_phys
    cout_phys = _cpad(cout)
    kw_, kb_ = jax.random.split(key)
    std = 1.4142 / (k * (cin ** 0.5))                    # He-ish init
    w = jax.random.normal(kw_, (k, k, cin, cout), jnp.float32) * std
    b = (jax.random.normal(kb_, (cout,), jnp.float32) * 0.05) if use_bias \
        else jnp.zeros((cout,), jnp.float32)
    eps = 1e-5
    if bn:   # inference BN: gamma=1, beta=0, running mean=0, running var=1
        scale = jnp.full((cout,), 1.0 / (1.0 + eps) ** 0.5, jnp.float32)
    else:
        scale = jnp.ones((cout,), jnp.float32)
    shift = b * scale                                    # fold bias into shift
    # Zero-pad input channels (to the producer's padded layout) and output
    # channels (lane-dense stores); pre-cast to bf16 once at build time.
    w = jnp.pad(w, ((0, 0), (0, 0), (0, cin_phys - cin), (0, cout_phys - cout)))
    scale = jnp.pad(scale, (0, cout_phys - cout)).reshape(1, -1)
    shift = jnp.pad(shift, (0, cout_phys - cout)).reshape(1, -1)
    return {'wmat': w.reshape(k * k, cin_phys, cout_phys).astype(jnp.bfloat16),
            'ksize': (k, k, cin, cout),
            'cin_phys': cin_phys, 'cout_phys': cout_phys,
            'scale': scale, 'shift': shift}


def bottleneck_params(key, inplanes, planes, stride, first, in_phys):
    keys = jax.random.split(key, 4)
    c1 = conv_params(keys[0], inplanes, planes, 1, use_bias=False, bn=True,
                     cin_phys=in_phys)
    c2 = conv_params(keys[1], planes, planes, 3, use_bias=False, bn=True,
                     cin_phys=c1['cout_phys'])
    c3 = conv_params(keys[2], planes, planes * EXPANSION, 1, use_bias=False,
                     bn=True, cin_phys=c2['cout_phys'])
    p = {'conv1': c1, 'conv2': c2, 'conv3': c3, 'stride': stride,
         'downsample': None, 'out_phys': c3['cout_phys']}
    if first and (stride != 1 or inplanes != planes * EXPANSION):
        p['downsample'] = conv_params(keys[3], inplanes, planes * EXPANSION, 1,
                                      use_bias=False, bn=True, cin_phys=in_phys)
    return p


def bottleneck_forward(x, p):
    identity = x
    out = conv2d(x, p['conv1'], stride=1, pad=0, act=True)
    out = conv2d(out, p['conv2'], stride=p['stride'], pad=1, act=True)
    if p['downsample'] is not None:
        identity = conv2d(x, p['downsample'], stride=p['stride'], pad=0, act=False)
    # conv3 + BN + residual add + LeakyReLU fused in one Pallas kernel call.
    out = conv2d(out, p['conv3'], stride=1, pad=0, act=True, residual=identity)
    return out


def make_resnet_params(key, layers, in_channels, num_classes):
    keys = iter(jax.random.split(key, 64))
    p1 = conv_params(next(keys), in_channels, 64, 7, use_bias=True, bn=False,
                     cin_phys=in_channels)
    p2 = conv_params(next(keys), 64, 64, 3, use_bias=True, bn=True,
                     cin_phys=p1['cout_phys'])
    p3 = conv_params(next(keys), 64, 64, 3, use_bias=True, bn=True,
                     cin_phys=p2['cout_phys'])
    params = {'begin1': p1, 'begin2': p2, 'begin3': p3}
    inplanes, in_phys = 64, p3['cout_phys']
    for li, (planes, n, stride) in enumerate(
            zip((64, 128, 256, 512), layers, (1, 2, 2, 2)), start=1):
        blocks = [bottleneck_params(next(keys), inplanes, planes, stride,
                                    first=True, in_phys=in_phys)]
        inplanes, in_phys = planes * EXPANSION, blocks[0]['out_phys']
        for _ in range(1, n):
            blocks.append(bottleneck_params(next(keys), inplanes, planes, 1,
                                            first=False, in_phys=in_phys))
            in_phys = blocks[-1]['out_phys']
        params[f'layer{li}'] = blocks
    params['fusion'] = conv_params(next(keys), 2048, 512, 3, use_bias=True,
                                   bn=False, cin_phys=in_phys)
    kfc_w, kfc_b = jax.random.split(next(keys))
    params['fc_w'] = (jax.random.normal(kfc_w, (512, num_classes), jnp.float32)
                      * (1.0 / 512 ** 0.5)).astype(jnp.bfloat16)
    params['fc_scale'] = jnp.ones((1, num_classes), jnp.float32)
    params['fc_shift'] = (jax.random.normal(kfc_b, (num_classes,), jnp.float32)
                          * 0.05).reshape(1, -1)
    return params


# ----------------------------------------------------------------------------
# Full forward pass (matches ResNet_BN.forward).
# ----------------------------------------------------------------------------
def resnet_bn_forward(x_nchw, params):
    x = jnp.transpose(x_nchw, (0, 2, 3, 1)).astype(jnp.bfloat16)  # NCHW -> NHWC
    x = conv2d(x, params['begin1'], stride=1, pad=3, act=True)
    x = conv2d(x, params['begin2'], stride=2, pad=1, act=True)
    x = conv2d(x, params['begin3'], stride=2, pad=1, act=True)
    for li in (1, 2, 3, 4):
        for blk in params[f'layer{li}']:
            x = bottleneck_forward(x, blk)
    x = conv2d(x, params['fusion'], stride=1, pad=1, act=True)
    feat = jnp.mean(x.astype(jnp.float32), axis=(1, 2))           # avgpool+flatten
    y = fused_matmul(feat, params['fc_w'], params['fc_scale'],
                     params['fc_shift'], act=False, out_dtype=jnp.float32)
    return y


if __name__ == "__main__":
    key = jax.random.PRNGKey(0)
    k_in, k_par = jax.random.split(key)

    B, C_IN, S = 2, 4, 16
    NUM_CLASSES = 16
    LAYERS = (1, 1, 1, 1)          # one Bottleneck per stage (small synthetic config)

    x = jax.random.normal(k_in, (B, C_IN, S, S), jnp.float32)
    params = make_resnet_params(k_par, LAYERS, in_channels=C_IN,
                                num_classes=NUM_CLASSES)

    out = resnet_bn_forward(x, params)
    out = jax.block_until_ready(out)
    assert out.shape == (B, NUM_CLASSES), out.shape
    assert bool(jnp.all(jnp.isfinite(out)))
    print("KERNEL_OK")
</pallas_src>

<mosaic_0001>
module attributes {stable_mosaic.version = 11 : i64} {
  func.func @_gemm_bn_act_kernel(%arg0: i32, %arg1: i32, %arg2: i32, %arg3: memref<256x196xbf16, #tpu.memory_space<vmem>>, %arg4: memref<196x128xbf16, #tpu.memory_space<vmem>>, %arg5: memref<1x128xf32, #tpu.memory_space<vmem>>, %arg6: memref<1x128xf32, #tpu.memory_space<vmem>>, %arg7: memref<256x128xbf16, #tpu.memory_space<vmem>>, %arg8: memref<256x128xf32, #tpu.memory_space<vmem>>) attributes {dimension_semantics = [#tpu.dimension_semantics<parallel>, #tpu.dimension_semantics<parallel>, #tpu.dimension_semantics<arbitrary>], iteration_bounds = array<i64: 2, 1, 1>, scalar_prefetch = 0 : i64, scratch_operands = 1 : i64, tpu.core_type = #tpu.core_type<tc>, window_params = [{transform_indices = @transform_0, window_bounds = array<i64: 256, 196>}, {transform_indices = @transform_1, window_bounds = array<i64: 196, 128>}, {transform_indices = @transform_2, window_bounds = array<i64: 1, 128>}, {transform_indices = @transform_3, window_bounds = array<i64: 1, 128>}, {transform_indices = @transform_4, window_bounds = array<i64: 256, 128>}]} {
    %c0_i32 = arith.constant 0 : i32
    %0 = arith.cmpi eq, %arg2, %c0_i32 : i32
    %1 = arith.extui %0 : i1 to i32
    %c0_i32_0 = arith.constant 0 : i32
    %2 = arith.cmpi ne, %1, %c0_i32_0 : i32
    scf.if %2 {
      %cst_10 = arith.constant 0.000000e+00 : f32
      %12 = vector.broadcast %cst_10 : f32 to vector<256x128xf32>
      %c0_11 = arith.constant 0 : index
      %c0_12 = arith.constant 0 : index
      %13 = vector.load %arg8[%c0_11, %c0_12] : memref<256x128xf32, #tpu.memory_space<vmem>>, vector<256x128xf32>
      tpu.vector_store %arg8[%c0_11, %c0_12], %12 {strides = array<i32>} : memref<256x128xf32, #tpu.memory_space<vmem>>, vector<256x128xf32>,
    } else {
    }
    %c0 = arith.constant 0 : index
    %c0_1 = arith.constant 0 : index
    %3 = vector.load %arg8[%c0, %c0_1] : memref<256x128xf32, #tpu.memory_space<vmem>>, vector<256x128xf32>
    %c0_2 = arith.constant 0 : index
    %c0_3 = arith.constant 0 : index
    %4 = vector.load %arg3[%c0_2, %c0_3] : memref<256x196xbf16, #tpu.memory_space<vmem>>, vector<256x196xbf16>
    %c0_4 = arith.constant 0 : index
    %c0_5 = arith.constant 0 : index
    %5 = vector.load %arg4[%c0_4, %c0_5] : memref<196x128xbf16, #tpu.memory_space<vmem>>, vector<196x128xbf16>
    %cst = arith.constant dense<0.000000e+00> : vector<256x128xf32>
    %6 = tpu.matmul %4, %5, %cst {dimension_numbers = #tpu.dot_dimension_numbers<[1], [0], [0], [1], [0, 0, 1, 1], [], []>} : vector<256x196xbf16>, vector<196x128xbf16>, vector<256x128xf32> -> vector<256x128xf32>
    %7 = arith.addf %3, %6 : vector<256x128xf32>
    %c0_6 = arith.constant 0 : index
    %c0_7 = arith.constant 0 : index
    %8 = vector.load %arg8[%c0_6, %c0_7] : memref<256x128xf32, #tpu.memory_space<vmem>>, vector<256x128xf32>
    tpu.vector_store %arg8[%c0_6, %c0_7], %7 {strides = array<i32>} : memref<256x128xf32, #tpu.memory_space<vmem>>, vector<256x128xf32>,
    %c0_i32_8 = arith.constant 0 : i32
    %9 = arith.cmpi eq, %arg2, %c0_i32_8 : i32
    %10 = arith.extui %9 : i1 to i32
    %c0_i32_9 = arith.constant 0 : i32
    %11 = arith.cmpi ne, %10, %c0_i32_9 : i32
    scf.if %11 {
      %c0_10 = arith.constant 0 : index
      %c0_11 = arith.constant 0 : index
      %12 = vector.load %arg8[%c0_10, %c0_11] : memref<256x128xf32, #tpu.memory_space<vmem>>, vector<256x128xf32>
      %c0_12 = arith.constant 0 : index
      %c0_13 = arith.constant 0 : index
      %13 = vector.load %arg5[%c0_12, %c0_13] : memref<1x128xf32, #tpu.memory_space<vmem>>, vector<1x128xf32>
      %14 = vector.broadcast %13 : vector<1x128xf32> to vector<256x128xf32>
      %15 = arith.mulf %12, %14 : vector<256x128xf32>
      %c0_14 = arith.constant 0 : index
      %c0_15 = arith.constant 0 : index
      %16 = vector.load %arg6[%c0_14, %c0_15] : memref<1x128xf32, #tpu.memory_space<vmem>>, vector<1x128xf32>
      %17 = vector.broadcast %16 : vector<1x128xf32> to vector<256x128xf32>
      %18 = arith.addf %15, %17 : vector<256x128xf32>
      %cst_16 = arith.constant 2.000000e-01 : f32
      %19 = vector.broadcast %cst_16 : f32 to vector<256x128xf32>
      %20 = arith.mulf %19, %18 : vector<256x128xf32>
      %21 = arith.maximumf %18, %20 : vector<256x128xf32>
      %22 = arith.truncf %21 : vector<256x128xf32> to vector<256x128xbf16>
      %c0_17 = arith.constant 0 : index
      %c0_18 = arith.constant 0 : index
      %23 = vector.load %arg7[%c0_17, %c0_18] : memref<256x128xbf16, #tpu.memory_space<vmem>>, vector<256x128xbf16>
      tpu.vector_store %arg7[%c0_17, %c0_18], %22 {strides = array<i32>} : memref<256x128xbf16, #tpu.memory_space<vmem>>, vector<256x128xbf16>,
    } else {
    }
    return
  }
  func.func @transform_0(%arg0: i32, %arg1: i32, %arg2: i32) -> (i32, i32) {
    %c0_i32 = arith.constant 0 : i32
    return %arg0, %arg2 : i32, i32
  }
  func.func @transform_1(%arg0: i32, %arg1: i32, %arg2: i32) -> (i32, i32) {
    %c0_i32 = arith.constant 0 : i32
    return %arg2, %arg1 : i32, i32
  }
  func.func @transform_2(%arg0: i32, %arg1: i32, %arg2: i32) -> (i32, i32) {
    %c0_i32 = arith.constant 0 : i32
    %c0_i32_0 = arith.constant 0 : i32
    return %c0_i32, %arg1 : i32, i32
  }
  func.func @transform_3(%arg0: i32, %arg1: i32, %arg2: i32) -> (i32, i32) {
    %c0_i32 = arith.constant 0 : i32
    %c0_i32_0 = arith.constant 0 : i32
    return %c0_i32, %arg1 : i32, i32
  }
  func.func @transform_4(%arg0: i32, %arg1: i32, %arg2: i32) -> (i32, i32) {
    %c0_i32 = arith.constant 0 : i32
    return %arg0, %arg1 : i32, i32
  }
}

</mosaic_0001>

<llo_original>
// kernel: tpu_custom_call.1
$region0: #{tpu_custom_call.1}
  #allocation0 [shape = 'u32[]', space=smem, size = 0x4, offset = 0x4, fixed_abs, tag = 'smem constant byte address 0x4 - core index']
  #allocation1 [shape = 'u32[144,128]{1,0:T(1,128)}', space=vmem, size = 0x12000, scoped, tag = 'internal scratch']
  #allocation2 [shape = 'f32[256,128]{1,0:T(8,128)}', space=vmem, size = 0x20000, scoped, tag = 'scratch operand']
  %s0 = inlined_call_operand.vmem [shape: bf16[512,196], index: 0, kind: input, shape index: {}]
  %s1 = inlined_call_operand.vmem [shape: bf16[196,128], index: 1, kind: input, shape index: {}]
  %s2 = inlined_call_operand.vmem [shape: f32[1,128], index: 2, kind: input, shape index: {}]
  %s3 = inlined_call_operand.vmem [shape: f32[1,128], index: 3, kind: input, shape index: {}]
  %s4 = inlined_call_operand.hbm [shape: bf16[512,128], index: 4, kind: output, shape index: {}]
  %s5 = sld [smem:[#allocation0]]
  $region57: #{tpu_custom_call.1} parent=0
    _
  %s7 = ssub.s32 1, %s5
  %s8 = scalar_select 0, %s7, %s5
  $region1: #{tpu_custom_call.1} parent=0
    #allocation3 [shape = 'u8[131072]{0}', space=vmem, size = 0x20000, scoped, tag = 'output window, operand 0']
    #allocation4 [shape = 's32[2]{0}', space=sflag, size = 0x8, scoped, tag = 'scoped memory for tpu_custom_call.1']
    %9 = vsyncpa [#allocation4], 0
    %s10 = scalar_lea.sflag [#allocation4], 1
    %11 = vsyncpa %s10, 0
    loop: start=0, step=1, limit=4
    $region2: #{tpu_custom_call.1} parent=1 // loop_pre_header
      _
    $region3: #{tpu_custom_call.1} parent=1 // loop_header
      %s13 = sphi 0, %s17
      %p14 = scmp.ge.s32.totalorder %s13, 4
      %s20 = sphi 0, %s39
      %s21 = sphi 0, %s35
      %s22 = sphi 0, %s31
      %s23 = sphi 0, %s20
      %s24 = sphi 0, %s21
      %s25 = sphi 0, %s22
      %s26 = sphi 0, %s23
      %s27 = sphi 0, %s24
      %s28 = sphi 0, %s25
      %s44 = sphi 0, %s46
      %s47 = sphi 0, %s44
      %s48 = sphi 0, %s47
      %s64 = sphi 0, %s48
      %s72 = sphi 0, %s74
      %s75 = sphi 0, %s72
      %s76 = sphi 0, %s75
      %s92 = sphi 0, %s76
      %s98 = sphi 0, %s100
      %s101 = sphi 0, %s98
      %s102 = sphi 0, %s101
      %s118 = sphi 0, %s102
      %s124 = sphi 0, %s126
      %s127 = sphi 0, %s124
      %s128 = sphi 0, %s127
      %s144 = sphi 0, %s128
      %s152 = sphi 0, %s154
      %s155 = sphi 0, %s152
      %s156 = sphi 0, %s155
      %s172 = sphi 0, %s156
    $region4: #{tpu_custom_call.1} parent=1 // loop_header_branch
      %16 = sbr.rel (%p14) target = $region8
    $region5: #{tpu_custom_call.1} parent=1 // loop_body
      %s18 = ssub.s32 %s13, 1
      %s19 = ssub.s32 %s13, 2
      %s29 = sadd.s32 1, %s22
      %p30 = scmp.ge.s32.totalorder %s29, 1
      %s31 = scalar_select %p30, 0, %s29
      %s32 = sadd.s32 1, %s21
      %s33 = scalar_select %p30, %s32, %s21
      %p34 = scmp.ge.s32.totalorder %s33, 1
      %s35 = scalar_select %p34, 0, %s33
      %s36 = sadd.s32 1, %s20
      %s37 = scalar_select %p34, %s36, %s20
      %p38 = scmp.ge.s32.totalorder %s37, 2
      %s39 = scalar_select %p38, 0, %s37
      %s40 = ssub.s32 %s20, %s39
      %s41 = ssub.s32 %s22, %s31
      %s42 = sor.u32 %s40, %s41
      %p43 = scmp.eq.s32.totalorder %s42, 0
      %s45 = sadd.s32 %s44, 1
      %s46 = scalar_select %p43, %s44, %s45
      %p49 = pneg %p43
      %p50 = scmp.eq.s32.totalorder %s13, 1
      %p51 = por %p49, %p50
      %p52 = scmp.ne.s32.totalorder %s44, %s47
      %p53 = scmp.eq.s32.totalorder %s13, 0
      %p54 = por %p52, %p53
      %p55 = scmp.ne.s32.totalorder %s44, %s47
      %p56 = scmp.eq.s32.totalorder %s18, 1
      %p57 = por %p55, %p56
      %p58 = scmp.ne.s32.totalorder %s47, %s48
      %p59 = scmp.eq.s32.totalorder %s18, 0
      %p60 = por %p58, %p59
      %p61 = scmp.ne.s32.totalorder %s47, %s48
      %p62 = scmp.eq.s32.totalorder %s19, 1
      %p63 = por %p61, %p62
      %p65 = scmp.ne.s32.totalorder %s48, %s64
      %p66 = scmp.eq.s32.totalorder %s19, 0
      %p67 = por %p65, %p66
      %s68 = ssub.s32 %s22, %s31
      %s69 = ssub.s32 %s21, %s35
      %s70 = sor.u32 %s68, %s69
      %p71 = scmp.eq.s32.totalorder %s70, 0
      %s73 = sadd.s32 %s72, 1
      %s74 = scalar_select %p71, %s72, %s73
      %p77 = pneg %p71
      %p78 = scmp.eq.s32.totalorder %s13, 1
      %p79 = por %p77, %p78
      %p80 = scmp.ne.s32.totalorder %s72, %s75
      %p81 = scmp.eq.s32.totalorder %s13, 0
      %p82 = por %p80, %p81
      %p83 = scmp.ne.s32.totalorder %s72, %s75
      %p84 = scmp.eq.s32.totalorder %s18, 1
      %p85 = por %p83, %p84
      %p86 = scmp.ne.s32.totalorder %s75, %s76
      %p87 = scmp.eq.s32.totalorder %s18, 0
      %p88 = por %p86, %p87
      %p89 = scmp.ne.s32.totalorder %s75, %s76
      %p90 = scmp.eq.s32.totalorder %s19, 1
      %p91 = por %p89, %p90
      %p93 = scmp.ne.s32.totalorder %s76, %s92
      %p94 = scmp.eq.s32.totalorder %s19, 0
      %p95 = por %p93, %p94
      %s96 = ssub.s32 %s21, %s35
      %p97 = scmp.eq.s32.totalorder %s96, 0
      %s99 = sadd.s32 %s98, 1
      %s100 = scalar_select %p97, %s98, %s99
      %p103 = pneg %p97
      %p104 = scmp.eq.s32.totalorder %s13, 1
      %p105 = por %p103, %p104
      %p106 = scmp.ne.s32.totalorder %s98, %s101
      %p107 = scmp.eq.s32.totalorder %s13, 0
      %p108 = por %p106, %p107
      %p109 = scmp.ne.s32.totalorder %s98, %s101
      %p110 = scmp.eq.s32.totalorder %s18, 1
      %p111 = por %p109, %p110
      %p112 = scmp.ne.s32.totalorder %s101, %s102
      %p113 = scmp.eq.s32.totalorder %s18, 0
      %p114 = por %p112, %p113
      %p115 = scmp.ne.s32.totalorder %s101, %s102
      %p116 = scmp.eq.s32.totalorder %s19, 1
      %p117 = por %p115, %p116
      %p119 = scmp.ne.s32.totalorder %s102, %s118
      %p120 = scmp.eq.s32.totalorder %s19, 0
      %p121 = por %p119, %p120
      %s122 = ssub.s32 %s21, %s35
      %p123 = scmp.eq.s32.totalorder %s122, 0
      %s125 = sadd.s32 %s124, 1
      %s126 = scalar_select %p123, %s124, %s125
      %p129 = pneg %p123
      %p130 = scmp.eq.s32.totalorder %s13, 1
      %p131 = por %p129, %p130
      %p132 = scmp.ne.s32.totalorder %s124, %s127
      %p133 = scmp.eq.s32.totalorder %s13, 0
      %p134 = por %p132, %p133
      %p135 = scmp.ne.s32.totalorder %s124, %s127
      %p136 = scmp.eq.s32.totalorder %s18, 1
      %p137 = por %p135, %p136
      %p138 = scmp.ne.s32.totalorder %s127, %s128
      %p139 = scmp.eq.s32.totalorder %s18, 0
      %p140 = por %p138, %p139
      %p141 = scmp.ne.s32.totalorder %s127, %s128
      %p142 = scmp.eq.s32.totalorder %s19, 1
      %p143 = por %p141, %p142
      %p145 = scmp.ne.s32.totalorder %s128, %s144
      %p146 = scmp.eq.s32.totalorder %s19, 0
      %p147 = por %p145, %p146
      %s148 = ssub.s32 %s20, %s39
      %s149 = ssub.s32 %s21, %s35
      %s150 = sor.u32 %s148, %s149
      %p151 = scmp.eq.s32.totalorder %s150, 0
      %s153 = sadd.s32 %s152, 1
      %s154 = scalar_select %p151, %s152, %s153
      %p157 = pneg %p151
      %p158 = scmp.eq.s32.totalorder %s13, 1
      %p159 = por %p157, %p158
      %p160 = scmp.ne.s32.totalorder %s152, %s155
      %p161 = scmp.eq.s32.totalorder %s13, 0
      %p162 = por %p160, %p161
      %p163 = scmp.ne.s32.totalorder %s152, %s155
      %p164 = scmp.eq.s32.totalorder %s18, 1
      %p165 = por %p163, %p164
      %p166 = scmp.ne.s32.totalorder %s155, %s156
      %p167 = scmp.eq.s32.totalorder %s18, 0
      %p168 = por %p166, %p167
      %p169 = scmp.ne.s32.totalorder %s155, %s156
      %p170 = scmp.eq.s32.totalorder %s19, 1
      %p171 = por %p169, %p170
      %p173 = scmp.ne.s32.totalorder %s156, %s172
      %p174 = scmp.eq.s32.totalorder %s19, 0
      %p175 = por %p173, %p174
      %p176 = scmp.le.s32.totalorder 1, %s13
      %p177 = scmp.lt.s32.totalorder %s13, 3
      %p178 = pnand %p176, %p177
      %p179 = pneg %p178
      // Predicated region
      $region9: #{tpu_custom_call.1} parent=5 // pred_check
        _
      $region10: #{tpu_custom_call.1} parent=5 // pred_check_branch
        %181 = sbr.rel (%p178) target = $region12
      $region11: #{tpu_custom_call.1} parent=5 // pred_region
        %s182 = ssub.s32 %s13, 1
        // Predicated region
        $region13: #{tpu_custom_call.1} parent=11 // pred_check
          %p183 = pneg %p88
        $region14: #{tpu_custom_call.1} parent=11 // pred_check_branch
          %185 = sbr.rel (%p183) target = $region16
        $region15: #{tpu_custom_call.1} parent=11 // pred_region
          %s186 = smul.u32 25, %s25
          %p187 = scmp.lt.s32.totalorder %s186, 24
          %s188 = scalar_select %p187, %s186, 24
          %p189 = scmp.lt.s32.totalorder %s24, 0
          %s190 = scalar_select %p189, %s24, 0
          %s191 = sadd.s32 %s190, %s188
          %s192 = smul.addr %s191, 4
          %s193 = scalar_lea.vmem %s1, %s192
          %s194 = smul.u32 25, %s25
        $region16: #{tpu_custom_call.1} parent=11 // pred_fallthru
          _
        // Predicated region
        $region17: #{tpu_custom_call.1} parent=11 // pred_check
          %p195 = pneg %p114
        $region18: #{tpu_custom_call.1} parent=11 // pred_check_branch
          %197 = sbr.rel (%p195) target = $region20
        $region19: #{tpu_custom_call.1} parent=11 // pred_region
          %p198 = scmp.lt.s32.totalorder %s24, 0
          %s199 = scalar_select %p198, %s24, 0
          %s200 = scalar_lea.vmem %s2, %s199
        $region20: #{tpu_custom_call.1} parent=11 // pred_fallthru
          _
        // Predicated region
        $region21: #{tpu_custom_call.1} parent=11 // pred_check
          %p201 = pneg %p140
        $region22: #{tpu_custom_call.1} parent=11 // pred_check_branch
          %203 = sbr.rel (%p201) target = $region24
        $region23: #{tpu_custom_call.1} parent=11 // pred_region
          %p204 = scmp.lt.s32.totalorder %s24, 0
          %s205 = scalar_select %p204, %s24, 0
          %s206 = scalar_lea.vmem %s3, %s205
        $region24: #{tpu_custom_call.1} parent=11 // pred_fallthru
          _
      $region12: #{tpu_custom_call.1} parent=5 // pred_fallthru
        _
      %p207 = scmp.lt.s32.totalorder %s13, 2
      // Predicated region
      $region25: #{tpu_custom_call.1} parent=5 // pred_check
        %p208 = pneg %p207
      $region26: #{tpu_custom_call.1} parent=5 // pred_check_branch
        %210 = sbr.rel (%p208) target = $region28
      $region27: #{tpu_custom_call.1} parent=5 // pred_region
        // Predicated region
        $region29: #{tpu_custom_call.1} parent=27 // pred_check
          %p211 = pneg %p54
        $region30: #{tpu_custom_call.1} parent=27 // pred_check_branch
          %213 = sbr.rel (%p211) target = $region32
        $region31: #{tpu_custom_call.1} parent=27 // pred_region
          %s214 = smul.u32 32, %s20
          %s215 = smul.u32 2, %s22
          %p216 = scmp.lt.s32.totalorder %s214, 63
          %s217 = scalar_select %p216, %s214, 63
          %p218 = scmp.lt.s32.totalorder %s215, 1
          %s219 = scalar_select %p218, %s215, 1
          %s220 = smul.addr %s217, 2
          %s221 = sadd.s32 %s219, %s220
          %s222 = smul.addr %s221, 4
          %s223 = scalar_lea.vmem %s0, %s222
          %s224 = smul.u32 32, %s20
          %s225 = smul.u32 2, %s22
        $region32: #{tpu_custom_call.1} parent=27 // pred_fallthru
          _
      $region28: #{tpu_custom_call.1} parent=5 // pred_fallthru
        _
      %p226 = scmp.le.s32.totalorder 1, %s13
      %p227 = scmp.lt.s32.totalorder %s13, 3
      %p228 = pnand %p226, %p227
      %p229 = pneg %p228
      // Predicated region
      $region33: #{tpu_custom_call.1} parent=5 // pred_check
        _
      $region34: #{tpu_custom_call.1} parent=5 // pred_check_branch
        %231 = sbr.rel (%p228) target = $region36
      $region35: #{tpu_custom_call.1} parent=5 // pred_region
        %s232 = ssub.s32 %s13, 1
        %s233 = smul.u32 32, %s23
        %s234 = smul.u32 2, %s25
        %p235 = scmp.lt.s32.totalorder %s233, 63
        %s236 = scalar_select %p235, %s233, 63
        %p237 = scmp.lt.s32.totalorder %s234, 1
        %s238 = scalar_select %p237, %s234, 1
        %s239 = smul.addr %s236, 2
        %s240 = sadd.s32 %s238, %s239
        %s241 = smul.addr %s240, 4
        %s242 = scalar_lea.vmem %s0, %s241
        %p243 = pneg %p60
        %p244 = pneg %p57
        %s245 = smul.u32 25, %s25
        %p246 = scmp.lt.s32.totalorder %s245, 24
        %s247 = scalar_select %p246, %s245, 24
        %p248 = scmp.lt.s32.totalorder %s24, 0
        %s249 = scalar_select %p248, %s24, 0
        %s250 = sadd.s32 %s249, %s247
        %s251 = smul.addr %s250, 4
        %s252 = scalar_lea.vmem %s1, %s251
        %p253 = pneg %p88
        %p254 = pneg %p85
        %p255 = scmp.lt.s32.totalorder %s24, 0
        %s256 = scalar_select %p255, %s24, 0
        %s257 = scalar_lea.vmem %s2, %s256
        %p258 = pneg %p114
        %p259 = pneg %p111
        %p260 = scmp.lt.s32.totalorder %s24, 0
        %s261 = scalar_select %p260, %s24, 0
        %s262 = scalar_lea.vmem %s3, %s261
        %p263 = pneg %p140
        %p264 = pneg %p137
        %p265 = pneg %p168
        %p266 = pneg %p165
        %s267 = sand.u32 %s155, 1
        %s268 = scalar_lea.sflag [#allocation4], %s267
        %s269 = sand.u32 %s155, 1
        %s270 = smul.addr %s269, 128
        %s271 = scalar_lea.vmem [#allocation3], %s270
        %s272 = smul.u32 32, %s23
        %s273 = smul.u32 2, %s25
        %p274 = scmp.lt.s32.totalorder %s272, 63
        %s275 = scalar_select %p274, %s272, 63
        %p276 = scmp.lt.s32.totalorder %s273, 1
        %s277 = scalar_select %p276, %s273, 1
        %s278 = smul.addr %s275, 2
        %s279 = sadd.s32 %s277, %s278
        %s280 = smul.addr %s279, 4
        %s281 = scalar_lea.vmem %s0, %s280
        %s282 = smul.u32 32, %s23
        %s283 = smul.u32 2, %s25
        %s284 = smul.u32 25, %s25
        %p285 = scmp.lt.s32.totalorder %s284, 24
        %s286 = scalar_select %p285, %s284, 24
        %p287 = scmp.lt.s32.totalorder %s24, 0
        %s288 = scalar_select %p287, %s24, 0
        %s289 = sadd.s32 %s288, %s286
        %s290 = smul.addr %s289, 4
        %s291 = scalar_lea.vmem %s1, %s290
        %s292 = smul.u32 25, %s25
        %p293 = scmp.lt.s32.totalorder %s24, 0
        %s294 = scalar_select %p293, %s24, 0
        %s295 = scalar_lea.vmem %s2, %s294
        %p296 = scmp.lt.s32.totalorder %s24, 0
        %s297 = scalar_select %p296, %s24, 0
        %s298 = scalar_lea.vmem %s3, %s297
        %s299 = smul.u32 32, %s23
        %p301 = scmp.eq.s32.totalorder %s25, 0
        // Predicated region
        $region37: #{tpu_custom_call.1} parent=35 // pred_check
          %p302 = pneg %p301
        $region38: #{tpu_custom_call.1} parent=35 // pred_check_branch
          %304 = sbr.rel (%p302) target = $region40
        $region39: #{tpu_custom_call.1} parent=35 // pred_region
          %305 = vst [vmem:[#allocation2] sm:$0xff] 0.0
          %306 = vst [vmem:[#allocation2 + $0x8] sm:$0xff] 0.0
          %307 = vst [vmem:[#allocation2 + $0x10] sm:$0xff] 0.0
          %308 = vst [vmem:[#allocation2 + $0x18] sm:$0xff] 0.0
          %309 = vst [vmem:[#allocation2 + $0x20] sm:$0xff] 0.0
          %310 = vst [vmem:[#allocation2 + $0x28] sm:$0xff] 0.0
          %311 = vst [vmem:[#allocation2 + $0x30] sm:$0xff] 0.0
          %312 = vst [vmem:[#allocation2 + $0x38] sm:$0xff] 0.0
          %313 = vst [vmem:[#allocation2 + $0x40] sm:$0xff] 0.0
          %314 = vst [vmem:[#allocation2 + $0x48] sm:$0xff] 0.0
          %315 = vst [vmem:[#allocation2 + $0x50] sm:$0xff] 0.0
          %316 = vst [vmem:[#allocation2 + $0x58] sm:$0xff] 0.0
          %317 = vst [vmem:[#allocation2 + $0x60] sm:$0xff] 0.0
          %318 = vst [vmem:[#allocation2 + $0x68] sm:$0xff] 0.0
          %319 = vst [vmem:[#allocation2 + $0x70] sm:$0xff] 0.0
          %320 = vst [vmem:[#allocation2 + $0x78] sm:$0xff] 0.0
          %321 = vst [vmem:[#allocation2 + $0x80] sm:$0xff] 0.0
          %322 = vst [vmem:[#allocation2 + $0x88] sm:$0xff] 0.0
          %323 = vst [vmem:[#allocation2 + $0x90] sm:$0xff] 0.0
          %324 = vst [vmem:[#allocation2 + $0x98] sm:$0xff] 0.0
          %325 = vst [vmem:[#allocation2 + $0xa0] sm:$0xff] 0.0
          %326 = vst [vmem:[#allocation2 + $0xa8] sm:$0xff] 0.0
          %327 = vst [vmem:[#allocation2 + $0xb0] sm:$0xff] 0.0
          %328 = vst [vmem:[#allocation2 + $0xb8] sm:$0xff] 0.0
          %329 = vst [vmem:[#allocation2 + $0xc0] sm:$0xff] 0.0
          %330 = vst [vmem:[#allocation2 + $0xc8] sm:$0xff] 0.0
          %331 = vst [vmem:[#allocation2 + $0xd0] sm:$0xff] 0.0
          %332 = vst [vmem:[#allocation2 + $0xd8] sm:$0xff] 0.0
          %333 = vst [vmem:[#allocation2 + $0xe0] sm:$0xff] 0.0
          %334 = vst [vmem:[#allocation2 + $0xe8] sm:$0xff] 0.0
          %335 = vst [vmem:[#allocation2 + $0xf0] sm:$0xff] 0.0
          %336 = vst [vmem:[#allocation2 + $0xf8] sm:$0xff] 0.0
        $region40: #{tpu_custom_call.1} parent=35 // pred_fallthru
          _
        %v337 = vld [vmem:[#allocation2] sm:$0xff]
        %v338 = vld [vmem:[#allocation2 + $0x8] sm:$0xff]
        %v339 = vld [vmem:[#allocation2 + $0x10] sm:$0xff]
        %v340 = vld [vmem:[#allocation2 + $0x18] sm:$0xff]
        %v341 = vld [vmem:[#allocation2 + $0x20] sm:$0xff]
        %v342 = vld [vmem:[#allocation2 + $0x28] sm:$0xff]
        %v343 = vld [vmem:[#allocation2 + $0x30] sm:$0xff]
        %v344 = vld [vmem:[#allocation2 + $0x38] sm:$0xff]
        %v345 = vld [vmem:[#allocation2 + $0x40] sm:$0xff]
        %v346 = vld [vmem:[#allocation2 + $0x48] sm:$0xff]
        %v347 = vld [vmem:[#allocation2 + $0x50] sm:$0xff]
        %v348 = vld [vmem:[#allocation2 + $0x58] sm:$0xff]
        %v349 = vld [vmem:[#allocation2 + $0x60] sm:$0xff]
        %v350 = vld [vmem:[#allocation2 + $0x68] sm:$0xff]
        %v351 = vld [vmem:[#allocation2 + $0x70] sm:$0xff]
        %v352 = vld [vmem:[#allocation2 + $0x78] sm:$0xff]
        %v353 = vld [vmem:[#allocation2 + $0x80] sm:$0xff]
        %v354 = vld [vmem:[#allocation2 + $0x88] sm:$0xff]
        %v355 = vld [vmem:[#allocation2 + $0x90] sm:$0xff]
        %v356 = vld [vmem:[#allocation2 + $0x98] sm:$0xff]
        %v357 = vld [vmem:[#allocation2 + $0xa0] sm:$0xff]
        %v358 = vld [vmem:[#allocation2 + $0xa8] sm:$0xff]
        %v359 = vld [vmem:[#allocation2 + $0xb0] sm:$0xff]
        %v360 = vld [vmem:[#allocation2 + $0xb8] sm:$0xff]
        %v361 = vld [vmem:[#allocation2 + $0xc0] sm:$0xff]
        %v362 = vld [vmem:[#allocation2 + $0xc8] sm:$0xff]
        %v363 = vld [vmem:[#allocation2 + $0xd0] sm:$0xff]
        %v364 = vld [vmem:[#allocation2 + $0xd8] sm:$0xff]
        %v365 = vld [vmem:[#allocation2 + $0xe0] sm:$0xff]
        %v366 = vld [vmem:[#allocation2 + $0xe8] sm:$0xff]
        %v367 = vld [vmem:[#allocation2 + $0xf0] sm:$0xff]
        %v368 = vld [vmem:[#allocation2 + $0xf8] sm:$0xff]
        %v369 = vld [vmem:[%s281] sm:$0xff]
        %v370 = vld [vmem:[%s281 + $0x8] sm:$0xff]
        %v371 = vld [vmem:[%s281 + $0x10] sm:$0xff]
        %v372 = vld [vmem:[%s281 + $0x18] sm:$0xff]
        %v373 = vld [vmem:[%s281 + $0x20] sm:$0xff]
        %v374 = vld [vmem:[%s281 + $0x28] sm:$0xff]
        %v375 = vld [vmem:[%s281 + $0x30] sm:$0xff]
        %v376 = vld [vmem:[%s281 + $0x38] sm:$0xff]
        %v377 = vld [vmem:[%s281 + $0x40] sm:$0xff]
        %v378 = vld [vmem:[%s281 + $0x48] sm:$0xff]
        %v379 = vld [vmem:[%s281 + $0x50] sm:$0xff]
        %v380 = vld [vmem:[%s281 + $0x58] sm:$0xff]
        %v381 = vld [vmem:[%s281 + $0x60] sm:$0xff]
        %v382 = vld [vmem:[%s281 + $0x68] sm:$0xff]
        %v383 = vld [vmem:[%s281 + $0x70] sm:$0xff]
        %v384 = vld [vmem:[%s281 + $0x78] sm:$0xff]
        %v385 = vld [vmem:[%s281 + $0x80] sm:$0xff]
        %v386 = vld [vmem:[%s281 + $0x88] sm:$0xff]
        %v387 = vld [vmem:[%s281 + $0x90] sm:$0xff]
        %v388 = vld [vmem:[%s281 + $0x98] sm:$0xff]
        %v389 = vld [vmem:[%s281 + $0xa0] sm:$0xff]
        %v390 = vld [vmem:[%s281 + $0xa8] sm:$0xff]
        %v391 = vld [vmem:[%s281 + $0xb0] sm:$0xff]
        %v392 = vld [vmem:[%s281 + $0xb8] sm:$0xff]
        %v393 = vld [vmem:[%s281 + $0xc0] sm:$0xff]
        %v394 = vld [vmem:[%s281 + $0xc8] sm:$0xff]
        %v395 = vld [vmem:[%s281 + $0xd0] sm:$0xff]
        %v396 = vld [vmem:[%s281 + $0xd8] sm:$0xff]
        %v397 = vld [vmem:[%s281 + $0xe0] sm:$0xff]
        %v398 = vld [vmem:[%s281 + $0xe8] sm:$0xff]
        %v399 = vld [vmem:[%s281 + $0xf0] sm:$0xff]
        %v400 = vld [vmem:[%s281 + $0xf8] sm:$0xff]
        %v401 = vld [vmem:[%s291] sm:$0xf]
        %v402 = vld [vmem:[%s291 + $0x4] sm:$0xf]
        %v403 = vld [vmem:[%s291 + $0x8] sm:$0xf]
        %v404 = vld [vmem:[%s291 + $0xc] sm:$0xf]
        %v405 = vld [vmem:[%s291 + $0x10] sm:$0xf]
        %v406 = vld [vmem:[%s291 + $0x14] sm:$0xf]
        %v407 = vld [vmem:[%s291 + $0x18] sm:$0xf]
        %v408 = vld [vmem:[%s291 + $0x1c] sm:$0xf]
        %v409 = vld [vmem:[%s291 + $0x20] sm:$0xf]
        %v410 = vld [vmem:[%s291 + $0x24] sm:$0xf]
        %v411 = vld [vmem:[%s291 + $0x28] sm:$0xf]
        %v412 = vld [vmem:[%s291 + $0x2c] sm:$0xf]
        %v413 = vld [vmem:[%s291 + $0x30] sm:$0xf]
        %v414 = vld [vmem:[%s291 + $0x34] sm:$0xf]
        %v415 = vld [vmem:[%s291 + $0x38] sm:$0xf]
        %v416 = vld [vmem:[%s291 + $0x3c] sm:$0xf]
        %v417 = vld [vmem:[%s291 + $0x40] sm:$0xf]
        %v418 = vld [vmem:[%s291 + $0x44] sm:$0xf]
        %v419 = vld [vmem:[%s291 + $0x48] sm:$0xf]
        %v420 = vld [vmem:[%s291 + $0x4c] sm:$0xf]
        %v421 = vld [vmem:[%s291 + $0x50] sm:$0xf]
        %v422 = vld [vmem:[%s291 + $0x54] sm:$0xf]
        %v423 = vld [vmem:[%s291 + $0x58] sm:$0xf]
        %v424 = vld [vmem:[%s291 + $0x5c] sm:$0xf]
        %v425 = vld [vmem:[%s291 + $0x60] sm:$0x3]
        %v458 = vunpack.c.l.b16 %v369
        %v459 = vunpack.c.h.b16 %v369
        %v460 = vunpack.c.l.b16 %v370
        %v461 = vunpack.c.h.b16 %v370
        %v462 = vunpack.c.l.b16 %v371
        %v463 = vunpack.c.h.b16 %v371
        %v464 = vunpack.c.l.b16 %v372
        %v465 = vunpack.c.h.b16 %v372
        %v466 = vunpack.c.l.b16 %v373
        %v467 = vunpack.c.h.b16 %v373
        %v468 = vunpack.c.l.b16 %v374
        %v469 = vunpack.c.h.b16 %v374
        %v470 = vunpack.c.l.b16 %v375
        %v471 = vunpack.c.h.b16 %v375
        %v472 = vunpack.c.l.b16 %v376
        %v473 = vunpack.c.h.b16 %v376
        %v474 = vunpack.c.l.b16 %v377
        %v475 = vunpack.c.h.b16 %v377
        %v476 = vunpack.c.l.b16 %v378
        %v477 = vunpack.c.h.b16 %v378
        %v478 = vunpack.c.l.b16 %v379
        %v479 = vunpack.c.h.b16 %v379
        %v480 = vunpack.c.l.b16 %v380
        %v481 = vunpack.c.h.b16 %v380
        %v482 = vunpack.c.l.b16 %v381
        %v483 = vunpack.c.h.b16 %v381
        %v484 = vunpack.c.l.b16 %v382
        %v485 = vunpack.c.h.b16 %v382
        %v486 = vunpack.c.l.b16 %v383
        %v487 = vunpack.c.h.b16 %v383
        %v488 = vunpack.c.l.b16 %v384
        %v489 = vunpack.c.h.b16 %v384
        %v490 = vunpack.c.l.b16 %v385
        %v491 = vunpack.c.h.b16 %v385
        %v492 = vunpack.c.l.b16 %v386
        %v493 = vunpack.c.h.b16 %v386
        %v494 = vunpack.c.l.b16 %v387
        %v495 = vunpack.c.h.b16 %v387
        %v496 = vunpack.c.l.b16 %v388
        %v497 = vunpack.c.h.b16 %v388
        %v498 = vunpack.c.l.b16 %v389
        %v499 = vunpack.c.h.b16 %v389
        %v500 = vunpack.c.l.b16 %v390
        %v501 = vunpack.c.h.b16 %v390
        %v502 = vunpack.c.l.b16 %v391
        %v503 = vunpack.c.h.b16 %v391
        %v504 = vunpack.c.l.b16 %v392
        %v505 = vunpack.c.h.b16 %v392
        %v506 = vunpack.c.l.b16 %v393
        %v507 = vunpack.c.h.b16 %v393
        %v508 = vunpack.c.l.b16 %v394
        %v509 = vunpack.c.h.b16 %v394
        %v510 = vunpack.c.l.b16 %v395
        %v511 = vunpack.c.h.b16 %v395
        %v512 = vunpack.c.l.b16 %v396
        %v513 = vunpack.c.h.b16 %v396
        %v514 = vunpack.c.l.b16 %v397
        %v515 = vunpack.c.h.b16 %v397
        %v516 = vunpack.c.l.b16 %v398
        %v517 = vunpack.c.h.b16 %v398
        %v518 = vunpack.c.l.b16 %v399
        %v519 = vunpack.c.h.b16 %v399
        %v520 = vunpack.c.l.b16 %v400
        %v521 = vunpack.c.h.b16 %v400
        %v522 = vpack.c.b16 %v460, %v458
        %v523 = vpack.c.b16 %v461, %v459
        %v524 = vpack.c.b16 %v464, %v462
        %v525 = vpack.c.b16 %v465, %v463
        %v526 = vpack.c.b16 %v468, %v466
        %v527 = vpack.c.b16 %v469, %v467
        %v528 = vpack.c.b16 %v472, %v470
        %v529 = vpack.c.b16 %v473, %v471
        %v530 = vpack.c.b16 %v476, %v474
        %v531 = vpack.c.b16 %v477, %v475
        %v532 = vpack.c.b16 %v480, %v478
        %v533 = vpack.c.b16 %v481, %v479
        %v534 = vpack.c.b16 %v484, %v482
        %v535 = vpack.c.b16 %v485, %v483
        %v536 = vpack.c.b16 %v488, %v486
        %v537 = vpack.c.b16 %v489, %v487
        %v538 = vpack.c.b16 %v492, %v490
        %v539 = vpack.c.b16 %v493, %v491
        %v540 = vpack.c.b16 %v496, %v494
        %v541 = vpack.c.b16 %v497, %v495
        %v542 = vpack.c.b16 %v500, %v498
        %v543 = vpack.c.b16 %v501, %v499
        %v544 = vpack.c.b16 %v504, %v502
        %v545 = vpack.c.b16 %v505, %v503
        %v546 = vpack.c.b16 %v508, %v506
        %v547 = vpack.c.b16 %v509, %v507
        %v548 = vpack.c.b16 %v512, %v510
        %v549 = vpack.c.b16 %v513, %v511
        %v550 = vpack.c.b16 %v516, %v514
        %v551 = vpack.c.b16 %v517, %v515
        %v552 = vpack.c.b16 %v520, %v518
        %v553 = vpack.c.b16 %v521, %v519
        %v595 = vunpack.c.l.b16 %v401
        %v596 = vunpack.c.l.b16 %v402
        %v597 = vunpack.c.l.b16 %v403
        %v598 = vunpack.c.l.b16 %v404
        %v599 = vunpack.c.l.b16 %v405
        %v600 = vunpack.c.l.b16 %v406
        %v601 = vunpack.c.l.b16 %v407
        %v602 = vunpack.c.l.b16 %v408
        %v603 = vunpack.c.l.b16 %v409
        %v604 = vunpack.c.l.b16 %v410
        %v605 = vunpack.c.l.b16 %v411
        %v606 = vunpack.c.l.b16 %v412
        %v607 = vunpack.c.l.b16 %v413
        %v608 = vunpack.c.l.b16 %v414
        %v609 = vunpack.c.l.b16 %v415
        %v610 = vunpack.c.l.b16 %v416
        %v611 = vunpack.c.l.b16 %v417
        %v612 = vunpack.c.l.b16 %v418
        %v613 = vunpack.c.l.b16 %v419
        %v614 = vunpack.c.l.b16 %v420
        %v615 = vunpack.c.l.b16 %v421
        %v616 = vunpack.c.l.b16 %v422
        %v617 = vunpack.c.l.b16 %v423
        %v618 = vunpack.c.l.b16 %v424
        %v619 = vunpack.c.l.b16 %v425
        %v620 = vpack.c.b16 %v596, %v595
        %v621 = vpack.c.b16 %v598, %v597
        %v622 = vpack.c.b16 %v600, %v599
        %v623 = vpack.c.b16 %v602, %v601
        %v624 = vpack.c.b16 %v604, %v603
        %v625 = vpack.c.b16 %v606, %v605
        %v626 = vpack.c.b16 %v608, %v607
        %v627 = vpack.c.b16 %v610, %v609
        %v628 = vpack.c.b16 %v612, %v611
        %v629 = vpack.c.b16 %v614, %v613
        %v630 = vpack.c.b16 %v616, %v615
        %v631 = vpack.c.b16 %v618, %v617
        %v632 = vpack.c.b16 %v619, %v619
        %vm645 = vcmask 556032
        %v647 = vsel %vm645, %v523, 0
        %v650 = vsel %vm645, %v525, 0
        %v653 = vsel %vm645, %v527, 0
        %v656 = vsel %vm645, %v529, 0
        %v659 = vsel %vm645, %v531, 0
        %v662 = vsel %vm645, %v533, 0
        %v665 = vsel %vm645, %v535, 0
        %v668 = vsel %vm645, %v537, 0
        %v671 = vsel %vm645, %v539, 0
        %v674 = vsel %vm645, %v541, 0
        %v677 = vsel %vm645, %v543, 0
        %v680 = vsel %vm645, %v545, 0
        %v683 = vsel %vm645, %v547, 0
        %v686 = vsel %vm645, %v549, 0
        %v689 = vsel %vm645, %v551, 0
        %v692 = vsel %vm645, %v553, 0
        %vm694 = vcmask 1041408
        %v696 = vsel %vm694, %v632, 0
        %698 = vmatprep.subr.bf16.mxu0 0
        %699 = vmatpush1.bf16.msra.mxu0 %v620
        %700 = vmatprep.subr.bf16.mxu0 0
        %701 = vmatpush1.bf16.msra.mxu0 %v621
        %702 = vmatprep.subr.bf16.mxu0 0
        %703 = vmatpush1.bf16.msra.mxu0 %v622
        %704 = vmatprep.subr.bf16.mxu0 0
        %705 = vmatpush1.bf16.msra.mxu0 %v623
        %706 = vmatprep.subr.bf16.mxu0 0
        %707 = vmatpush1.bf16.msra.mxu0 %v624
        %708 = vmatprep.subr.bf16.mxu0 0
        %709 = vmatpush1.bf16.msra.mxu0 %v625
        %710 = vmatprep.subr.bf16.mxu0 0
        %711 = vmatpush1.bf16.msra.mxu0 %v626
        %712 = vmatprep.subr.bf16.mxu0 0
        %713 = vmatpush1.bf16.msra.mxu0 %v627
        %714 = vmatprep.subr.bf16.mxu0 0
        %715 = vmatpush1.bf16.msra.mxu0 %v628
        %716 = vmatprep.subr.bf16.mxu0 0
        %717 = vmatpush1.bf16.msra.mxu0 %v629
        %718 = vmatprep.subr.bf16.mxu0 0
        %719 = vmatpush1.bf16.msra.mxu0 %v630
        %720 = vmatprep.subr.bf16.mxu0 0
        %721 = vmatpush1.bf16.msra.mxu0 %v631
        %722 = vmatprep.subr.bf16.mxu0 0
        %723 = vmatpush1.bf16.msra.mxu0 %v696
        %724 = vmatprep.subr.bf16.mxu0 0
        %725 = vmatpush1.bf16.msra.mxu0 0
        %726 = vmatprep.subr.bf16.mxu0 0
        %727 = vmatpush1.bf16.msra.mxu0 0
        %728 = vmatprep.subr.bf16.mxu0 0
        %729 = vmatpush1.bf16.msra.mxu0 0
        %730 = vmatprep.mubr.bf16.mxu0 %v647
        %731 = vmatmul.mubr.bf16.gmra.mrb[0].mxu0 %v522
        %v732 = vpop.f32.mrb[0].mxu0
        %v733 = vadd.f32 0.0, %v732
        %v734 = vpop.f32.mrb[0].mxu0
        %v735 = vpop.f32.mrb[0].mxu0
        %v736 = vadd.f32 0.0, %v735
        %v737 = vpop.f32.mrb[0].mxu0
        %738 = vmatprep.mubr.bf16.mxu0 %v650
        %739 = vmatmul.mubr.bf16.gmra.mrb[0].mxu0 %v524
        %v740 = vpop.f32.mrb[0].mxu0
        %v741 = vadd.f32 0.0, %v740
        %v742 = vpop.f32.mrb[0].mxu0
        %v743 = vpop.f32.mrb[0].mxu0
        %v744 = vadd.f32 0.0, %v743
        %v745 = vpop.f32.mrb[0].mxu0
        %746 = vmatprep.mubr.bf16.mxu0 %v653
        %747 = vmatmul.mubr.bf16.gmra.mrb[0].mxu0 %v526
        %v748 = vpop.f32.mrb[0].mxu0
        %v749 = vadd.f32 0.0, %v748
        %v750 = vpop.f32.mrb[0].mxu0
        %v751 = vpop.f32.mrb[0].mxu0
        %v752 = vadd.f32 0.0, %v751
        %v753 = vpop.f32.mrb[0].mxu0
        %754 = vmatprep.mubr.bf16.mxu0 %v656
        %755 = vmatmul.mubr.bf16.gmra.mrb[0].mxu0 %v528
        %v756 = vpop.f32.mrb[0].mxu0
        %v757 = vadd.f32 0.0, %v756
        %v758 = vpop.f32.mrb[0].mxu0
        %v759 = vpop.f32.mrb[0].mxu0
        %v760 = vadd.f32 0.0, %v759
        %v761 = vpop.f32.mrb[0].mxu0
        %762 = vmatprep.mubr.bf16.mxu0 %v659
        %763 = vmatmul.mubr.bf16.gmra.mrb[0].mxu0 %v530
        %v764 = vpop.f32.mrb[0].mxu0
        %v765 = vadd.f32 0.0, %v764
        %v766 = vpop.f32.mrb[0].mxu0
        %v767 = vpop.f32.mrb[0].mxu0
        %v768 = vadd.f32 0.0, %v767
        %v769 = vpop.f32.mrb[0].mxu0
        %770 = vmatprep.mubr.bf16.mxu0 %v662
        %771 = vmatmul.mubr.bf16.gmra.mrb[0].mxu0 %v532
        %v772 = vpop.f32.mrb[0].mxu0
        %v773 = vadd.f32 0.0, %v772
        %v774 = vpop.f32.mrb[0].mxu0
        %v775 = vpop.f32.mrb[0].mxu0
        %v776 = vadd.f32 0.0, %v775
        %v777 = vpop.f32.mrb[0].mxu0
        %778 = vmatprep.mubr.bf16.mxu0 %v665
        %779 = vmatmul.mubr.bf16.gmra.mrb[0].mxu0 %v534
        %v780 = vpop.f32.mrb[0].mxu0
        %v781 = vadd.f32 0.0, %v780
        %v782 = vpop.f32.mrb[0].mxu0
        %v783 = vpop.f32.mrb[0].mxu0
        %v784 = vadd.f32 0.0, %v783
        %v785 = vpop.f32.mrb[0].mxu0
        %786 = vmatprep.mubr.bf16.mxu0 %v668
        %787 = vmatmul.mubr.bf16.gmra.mrb[0].mxu0 %v536
        %v788 = vpop.f32.mrb[0].mxu0
        %v789 = vadd.f32 0.0, %v788
        %v790 = vpop.f32.mrb[0].mxu0
        %v791 = vpop.f32.mrb[0].mxu0
        %v792 = vadd.f32 0.0, %v791
        %v793 = vpop.f32.mrb[0].mxu0
        %794 = vmatprep.mubr.bf16.mxu0 %v671
        %795 = vmatmul.mubr.bf16.gmra.mrb[0].mxu0 %v538
        %v796 = vpop.f32.mrb[0].mxu0
        %v797 = vadd.f32 0.0, %v796
        %v798 = vpop.f32.mrb[0].mxu0
        %v799 = vpop.f32.mrb[0].mxu0
        %v800 = vadd.f32 0.0, %v799
        %v801 = vpop.f32.mrb[0].mxu0
        %802 = vmatprep.mubr.bf16.mxu0 %v674
        %803 = vmatmul.mubr.bf16.gmra.mrb[0].mxu0 %v540
        %v804 = vpop.f32.mrb[0].mxu0
        %v805 = vadd.f32 0.0, %v804
        %v806 = vpop.f32.mrb[0].mxu0
        %v807 = vpop.f32.mrb[0].mxu0
        %v808 = vadd.f32 0.0, %v807
        %v809 = vpop.f32.mrb[0].mxu0
        %810 = vmatprep.mubr.bf16.mxu0 %v677
        %811 = vmatmul.mubr.bf16.gmra.mrb[0].mxu0 %v542
        %v812 = vpop.f32.mrb[0].mxu0
        %v813 = vadd.f32 0.0, %v812
        %v814 = vpop.f32.mrb[0].mxu0
        %v815 = vpop.f32.mrb[0].mxu0
        %v816 = vadd.f32 0.0, %v815
        %v817 = vpop.f32.mrb[0].mxu0
        %818 = vmatprep.mubr.bf16.mxu0 %v680
        %819 = vmatmul.mubr.bf16.gmra.mrb[0].mxu0 %v544
        %v820 = vpop.f32.mrb[0].mxu0
        %v821 = vadd.f32 0.0, %v820
        %v822 = vpop.f32.mrb[0].mxu0
        %v823 = vpop.f32.mrb[0].mxu0
        %v824 = vadd.f32 0.0, %v823
        %v825 = vpop.f32.mrb[0].mxu0
        %826 = vmatprep.mubr.bf16.mxu0 %v683
        %827 = vmatmul.mubr.bf16.gmra.mrb[0].mxu0 %v546
        %v828 = vpop.f32.mrb[0].mxu0
        %v829 = vadd.f32 0.0, %v828
        %v830 = vpop.f32.mrb[0].mxu0
        %v831 = vpop.f32.mrb[0].mxu0
        %v832 = vadd.f32 0.0, %v831
        %v833 = vpop.f32.mrb[0].mxu0
        %834 = vmatprep.mubr.bf16.mxu0 %v686
        %835 = vmatmul.mubr.bf16.gmra.mrb[0].mxu0 %v548
        %v836 = vpop.f32.mrb[0].mxu0
        %v837 = vadd.f32 0.0, %v836
        %v838 = vpop.f32.mrb[0].mxu0
        %v839 = vpop.f32.mrb[0].mxu0
        %v840 = vadd.f32 0.0, %v839
        %v841 = vpop.f32.mrb[0].mxu0
        %842 = vmatprep.mubr.bf16.mxu0 %v689
        %843 = vmatmul.mubr.bf16.gmra.mrb[0].mxu0 %v550
        %v844 = vpop.f32.mrb[0].mxu0
        %v845 = vadd.f32 0.0, %v844
        %v846 = vpop.f32.mrb[0].mxu0
        %v847 = vpop.f32.mrb[0].mxu0
        %v848 = vadd.f32 0.0, %v847
        %v849 = vpop.f32.mrb[0].mxu0
        %850 = vmatprep.mubr.bf16.mxu0 %v692
        %851 = vmatmul.mubr.bf16.gmra.mrb[0].mxu0 %v552
        %v852 = vpop.f32.mrb[0].mxu0
        %v853 = vadd.f32 0.0, %v852
        %v854 = vpop.f32.mrb[0].mxu0
        %v855 = vpop.f32.mrb[0].mxu0
        %v856 = vadd.f32 0.0, %v855
        %v857 = vpop.f32.mrb[0].mxu0
        %858 = vdwg.mxu0
        %v859 = vadd.f32 %v337, %v733
        %v860 = vadd.f32 %v338, %v736
        %v861 = vadd.f32 %v339, %v741
        %v862 = vadd.f32 %v340, %v744
        %v863 = vadd.f32 %v341, %v749
        %v864 = vadd.f32 %v342, %v752
        %v865 = vadd.f32 %v343, %v757
        %v866 = vadd.f32 %v344, %v760
        %v867 = vadd.f32 %v345, %v765
        %v868 = vadd.f32 %v346, %v768
        %v869 = vadd.f32 %v347, %v773
        %v870 = vadd.f32 %v348, %v776
        %v871 = vadd.f32 %v349, %v781
        %v872 = vadd.f32 %v350, %v784
        %v873 = vadd.f32 %v351, %v789
        %v874 = vadd.f32 %v352, %v792
        %v875 = vadd.f32 %v353, %v797
        %v876 = vadd.f32 %v354, %v800
        %v877 = vadd.f32 %v355, %v805
        %v878 = vadd.f32 %v356, %v808
        %v879 = vadd.f32 %v357, %v813
        %v880 = vadd.f32 %v358, %v816
        %v881 = vadd.f32 %v359, %v821
        %v882 = vadd.f32 %v360, %v824
        %v883 = vadd.f32 %v361, %v829
        %v884 = vadd.f32 %v362, %v832
        %v885 = vadd.f32 %v363, %v837
        %v886 = vadd.f32 %v364, %v840
        %v887 = vadd.f32 %v365, %v845
        %v888 = vadd.f32 %v366, %v848
        %v889 = vadd.f32 %v367, %v853
        %v890 = vadd.f32 %v368, %v856
        %891 = vst [vmem:[#allocation2] sm:$0xff] %v859
        %892 = vst [vmem:[#allocation2 + $0x8] sm:$0xff] %v860
        %893 = vst [vmem:[#allocation2 + $0x10] sm:$0xff] %v861
        %894 = vst [vmem:[#allocation2 + $0x18] sm:$0xff] %v862
        %895 = vst [vmem:[#allocation2 + $0x20] sm:$0xff] %v863
        %896 = vst [vmem:[#allocation2 + $0x28] sm:$0xff] %v864
        %897 = vst [vmem:[#allocation2 + $0x30] sm:$0xff] %v865
        %898 = vst [vmem:[#allocation2 + $0x38] sm:$0xff] %v866
        %899 = vst [vmem:[#allocation2 + $0x40] sm:$0xff] %v867
        %900 = vst [vmem:[#allocation2 + $0x48] sm:$0xff] %v868
        %901 = vst [vmem:[#allocation2 + $0x50] sm:$0xff] %v869
        %902 = vst [vmem:[#allocation2 + $0x58] sm:$0xff] %v870
        %903 = vst [vmem:[#allocation2 + $0x60] sm:$0xff] %v871
        %904 = vst [vmem:[#allocation2 + $0x68] sm:$0xff] %v872
        %905 = vst [vmem:[#allocation2 + $0x70] sm:$0xff] %v873
        %906 = vst [vmem:[#allocation2 + $0x78] sm:$0xff] %v874
        %907 = vst [vmem:[#allocation2 + $0x80] sm:$0xff] %v875
        %908 = vst [vmem:[#allocation2 + $0x88] sm:$0xff] %v876
        %909 = vst [vmem:[#allocation2 + $0x90] sm:$0xff] %v877
        %910 = vst [vmem:[#allocation2 + $0x98] sm:$0xff] %v878
        %911 = vst [vmem:[#allocation2 + $0xa0] sm:$0xff] %v879
        %912 = vst [vmem:[#allocation2 + $0xa8] sm:$0xff] %v880
        %913 = vst [vmem:[#allocation2 + $0xb0] sm:$0xff] %v881
        %914 = vst [vmem:[#allocation2 + $0xb8] sm:$0xff] %v882
        %915 = vst [vmem:[#allocation2 + $0xc0] sm:$0xff] %v883
        %916 = vst [vmem:[#allocation2 + $0xc8] sm:$0xff] %v884
        %917 = vst [vmem:[#allocation2 + $0xd0] sm:$0xff] %v885
        %918 = vst [vmem:[#allocation2 + $0xd8] sm:$0xff] %v886
        %919 = vst [vmem:[#allocation2 + $0xe0] sm:$0xff] %v887
        %920 = vst [vmem:[#allocation2 + $0xe8] sm:$0xff] %v888
        %921 = vst [vmem:[#allocation2 + $0xf0] sm:$0xff] %v889
        %922 = vst [vmem:[#allocation2 + $0xf8] sm:$0xff] %v890
        // Predicated region
        $region41: #{tpu_custom_call.1} parent=35 // pred_check
          %p923 = pneg %p301
        $region42: #{tpu_custom_call.1} parent=35 // pred_check_branch
          %925 = sbr.rel (%p923) target = $region44
        $region43: #{tpu_custom_call.1} parent=35 // pred_region
          %v926 = vld [vmem:[#allocation2] sm:$0xff]
          %v927 = vld [vmem:[#allocation2 + $0x8] sm:$0xff]
          %v928 = vld [vmem:[#allocation2 + $0x10] sm:$0xff]
          %v929 = vld [vmem:[#allocation2 + $0x18] sm:$0xff]
          %v930 = vld [vmem:[#allocation2 + $0x20] sm:$0xff]
          %v931 = vld [vmem:[#allocation2 + $0x28] sm:$0xff]
          %v932 = vld [vmem:[#allocation2 + $0x30] sm:$0xff]
          %v933 = vld [vmem:[#allocation2 + $0x38] sm:$0xff]
          %v934 = vld [vmem:[#allocation2 + $0x40] sm:$0xff]
          %v935 = vld [vmem:[#allocation2 + $0x48] sm:$0xff]
          %v936 = vld [vmem:[#allocation2 + $0x50] sm:$0xff]
          %v937 = vld [vmem:[#allocation2 + $0x58] sm:$0xff]
          %v938 = vld [vmem:[#allocation2 + $0x60] sm:$0xff]
          %v939 = vld [vmem:[#allocation2 + $0x68] sm:$0xff]
          %v940 = vld [vmem:[#allocation2 + $0x70] sm:$0xff]
          %v941 = vld [vmem:[#allocation2 + $0x78] sm:$0xff]
          %v942 = vld [vmem:[#allocation2 + $0x80] sm:$0xff]
          %v943 = vld [vmem:[#allocation2 + $0x88] sm:$0xff]
          %v944 = vld [vmem:[#allocation2 + $0x90] sm:$0xff]
          %v945 = vld [vmem:[#allocation2 + $0x98] sm:$0xff]
          %v946 = vld [vmem:[#allocation2 + $0xa0] sm:$0xff]
          %v947 = vld [vmem:[#allocation2 + $0xa8] sm:$0xff]
          %v948 = vld [vmem:[#allocation2 + $0xb0] sm:$0xff]
          %v949 = vld [vmem:[#allocation2 + $0xb8] sm:$0xff]
          %v950 = vld [vmem:[#allocation2 + $0xc0] sm:$0xff]
          %v951 = vld [vmem:[#allocation2 + $0xc8] sm:$0xff]
          %v952 = vld [vmem:[#allocation2 + $0xd0] sm:$0xff]
          %v953 = vld [vmem:[#allocation2 + $0xd8] sm:$0xff]
          %v954 = vld [vmem:[#allocation2 + $0xe0] sm:$0xff]
          %v955 = vld [vmem:[#allocation2 + $0xe8] sm:$0xff]
          %v956 = vld [vmem:[#allocation2 + $0xf0] sm:$0xff]
          %v957 = vld [vmem:[#allocation2 + $0xf8] sm:$0xff]
          %v958 = vld [vmem:[%s295] sm:$0x1]
          %v960 = vlaneseq
          %v961 = vshrl.u32 %v960, 7
          %v962 = vsub.s32 0, %v961
          %v963 = vrot.slane %v958, %v962
          %v965 = vmul.f32 %v926, %v963
          %v966 = vmul.f32 %v927, %v963
          %v967 = vmul.f32 %v928, %v963
          %v968 = vmul.f32 %v929, %v963
          %v969 = vmul.f32 %v930, %v963
          %v970 = vmul.f32 %v931, %v963
          %v971 = vmul.f32 %v932, %v963
          %v972 = vmul.f32 %v933, %v963
          %v973 = vmul.f32 %v934, %v963
          %v974 = vmul.f32 %v935, %v963
          %v975 = vmul.f32 %v936, %v963
          %v976 = vmul.f32 %v937, %v963
          %v977 = vmul.f32 %v938, %v963
          %v978 = vmul.f32 %v939, %v963
          %v979 = vmul.f32 %v940, %v963
          %v980 = vmul.f32 %v941, %v963
          %v981 = vmul.f32 %v942, %v963
          %v982 = vmul.f32 %v943, %v963
          %v983 = vmul.f32 %v944, %v963
          %v984 = vmul.f32 %v945, %v963
          %v985 = vmul.f32 %v946, %v963
          %v986 = vmul.f32 %v947, %v963
          %v987 = vmul.f32 %v948, %v963
          %v988 = vmul.f32 %v949, %v963
          %v989 = vmul.f32 %v950, %v963
          %v990 = vmul.f32 %v951, %v963
          %v991 = vmul.f32 %v952, %v963
          %v992 = vmul.f32 %v953, %v963
          %v993 = vmul.f32 %v954, %v963
          %v994 = vmul.f32 %v955, %v963
          %v995 = vmul.f32 %v956, %v963
          %v996 = vmul.f32 %v957, %v963
          %v997 = vld [vmem:[%s298] sm:$0x1]
          %v999 = vlaneseq
          %v1000 = vshrl.u32 %v999, 7
          %v1001 = vsub.s32 0, %v1000
          %v1002 = vrot.slane %v997, %v1001
          %v1004 = vadd.f32 %v965, %v1002
          %v1005 = vadd.f32 %v966, %v1002
          %v1006 = vadd.f32 %v967, %v1002
          %v1007 = vadd.f32 %v968, %v1002
          %v1008 = vadd.f32 %v969, %v1002
          %v1009 = vadd.f32 %v970, %v1002
          %v1010 = vadd.f32 %v971, %v1002
          %v1011 = vadd.f32 %v972, %v1002
          %v1012 = vadd.f32 %v973, %v1002
          %v1013 = vadd.f32 %v974, %v1002
          %v1014 = vadd.f32 %v975, %v1002
          %v1015 = vadd.f32 %v976, %v1002
          %v1016 = vadd.f32 %v977, %v1002
          %v1017 = vadd.f32 %v978, %v1002
          %v1018 = vadd.f32 %v979, %v1002
          %v1019 = vadd.f32 %v980, %v1002
          %v1020 = vadd.f32 %v981, %v1002
          %v1021 = vadd.f32 %v982, %v1002
          %v1022 = vadd.f32 %v983, %v1002
          %v1023 = vadd.f32 %v984, %v1002
          %v1024 = vadd.f32 %v985, %v1002
          %v1025 = vadd.f32 %v986, %v1002
          %v1026 = vadd.f32 %v987, %v1002
          %v1027 = vadd.f32 %v988, %v1002
          %v1028 = vadd.f32 %v989, %v1002
          %v1029 = vadd.f32 %v990, %v1002
          %v1030 = vadd.f32 %v991, %v1002
          %v1031 = vadd.f32 %v992, %v1002
          %v1032 = vadd.f32 %v993, %v1002
          %v1033 = vadd.f32 %v994, %v1002
          %v1034 = vadd.f32 %v995, %v1002
          %v1035 = vadd.f32 %v996, %v1002
          %v1036 = vmul.f32 %v1004, 0.2
          %v1037 = vmul.f32 %v1005, 0.2
          %v1038 = vmul.f32 %v1006, 0.2
          %v1039 = vmul.f32 %v1007, 0.2
          %v1040 = vmul.f32 %v1008, 0.2
          %v1041 = vmul.f32 %v1009, 0.2
          %v1042 = vmul.f32 %v1010, 0.2
          %v1043 = vmul.f32 %v1011, 0.2
          %v1044 = vmul.f32 %v1012, 0.2
          %v1045 = vmul.f32 %v1013, 0.2
          %v1046 = vmul.f32 %v1014, 0.2
          %v1047 = vmul.f32 %v1015, 0.2
          %v1048 = vmul.f32 %v1016, 0.2
          %v1049 = vmul.f32 %v1017, 0.2
          %v1050 = vmul.f32 %v1018, 0.2
          %v1051 = vmul.f32 %v1019, 0.2
          %v1052 = vmul.f32 %v1020, 0.2
          %v1053 = vmul.f32 %v1021, 0.2
          %v1054 = vmul.f32 %v1022, 0.2
          %v1055 = vmul.f32 %v1023, 0.2
          %v1056 = vmul.f32 %v1024, 0.2
          %v1057 = vmul.f32 %v1025, 0.2
          %v1058 = vmul.f32 %v1026, 0.2
          %v1059 = vmul.f32 %v1027, 0.2
          %v1060 = vmul.f32 %v1028, 0.2
          %v1061 = vmul.f32 %v1029, 0.2
          %v1062 = vmul.f32 %v1030, 0.2
          %v1063 = vmul.f32 %v1031, 0.2
          %v1064 = vmul.f32 %v1032, 0.2
          %v1065 = vmul.f32 %v1033, 0.2
          %v1066 = vmul.f32 %v1034, 0.2
          %v1067 = vmul.f32 %v1035, 0.2
          %v1068 = vmax.f32 %v1004, %v1036
          %v1069 = vmax.f32 %v1005, %v1037
          %v1070 = vmax.f32 %v1006, %v1038
          %v1071 = vmax.f32 %v1007, %v1039
          %v1072 = vmax.f32 %v1008, %v1040
          %v1073 = vmax.f32 %v1009, %v1041
          %v1074 = vmax.f32 %v1010, %v1042
          %v1075 = vmax.f32 %v1011, %v1043
          %v1076 = vmax.f32 %v1012, %v1044
          %v1077 = vmax.f32 %v1013, %v1045
          %v1078 = vmax.f32 %v1014, %v1046
          %v1079 = vmax.f32 %v1015, %v1047
          %v1080 = vmax.f32 %v1016, %v1048
          %v1081 = vmax.f32 %v1017, %v1049
          %v1082 = vmax.f32 %v1018, %v1050
          %v1083 = vmax.f32 %v1019, %v1051
          %v1084 = vmax.f32 %v1020, %v1052
          %v1085 = vmax.f32 %v1021, %v1053
          %v1086 = vmax.f32 %v1022, %v1054
          %v1087 = vmax.f32 %v1023, %v1055
          %v1088 = vmax.f32 %v1024, %v1056
          %v1089 = vmax.f32 %v1025, %v1057
          %v1090 = vmax.f32 %v1026, %v1058
          %v1091 = vmax.f32 %v1027, %v1059
          %v1092 = vmax.f32 %v1028, %v1060
          %v1093 = vmax.f32 %v1029, %v1061
          %v1094 = vmax.f32 %v1030, %v1062
          %v1095 = vmax.f32 %v1031, %v1063
          %v1096 = vmax.f32 %v1032, %v1064
          %v1097 = vmax.f32 %v1033, %v1065
          %v1098 = vmax.f32 %v1034, %v1066
          %v1099 = vmax.f32 %v1035, %v1067
          %v1100 = vpack.c.bf16 %v1069, %v1068
          %v1101 = vpack.c.bf16 %v1071, %v1070
          %v1102 = vpack.c.bf16 %v1073, %v1072
          %v1103 = vpack.c.bf16 %v1075, %v1074
          %v1104 = vpack.c.bf16 %v1077, %v1076
          %v1105 = vpack.c.bf16 %v1079, %v1078
          %v1106 = vpack.c.bf16 %v1081, %v1080
          %v1107 = vpack.c.bf16 %v1083, %v1082
          %v1108 = vpack.c.bf16 %v1085, %v1084
          %v1109 = vpack.c.bf16 %v1087, %v1086
          %v1110 = vpack.c.bf16 %v1089, %v1088
          %v1111 = vpack.c.bf16 %v1091, %v1090
          %v1112 = vpack.c.bf16 %v1093, %v1092
          %v1113 = vpack.c.bf16 %v1095, %v1094
          %v1114 = vpack.c.bf16 %v1097, %v1096
          %v1115 = vpack.c.bf16 %v1099, %v1098
          %v1132 = vunpack.c.l.b16 %v1100
          %v1133 = vunpack.c.h.b16 %v1100
          %v1134 = vunpack.c.l.b16 %v1101
          %v1135 = vunpack.c.h.b16 %v1101
          %v1136 = vunpack.c.l.b16 %v1102
          %v1137 = vunpack.c.h.b16 %v1102
          %v1138 = vunpack.c.l.b16 %v1103
          %v1139 = vunpack.c.h.b16 %v1103
          %v1140 = vunpack.c.l.b16 %v1104
          %v1141 = vunpack.c.h.b16 %v1104
          %v1142 = vunpack.c.l.b16 %v1105
          %v1143 = vunpack.c.h.b16 %v1105
          %v1144 = vunpack.c.l.b16 %v1106
          %v1145 = vunpack.c.h.b16 %v1106
          %v1146 = vunpack.c.l.b16 %v1107
          %v1147 = vunpack.c.h.b16 %v1107
          %v1148 = vunpack.c.l.b16 %v1108
          %v1149 = vunpack.c.h.b16 %v1108
          %v1150 = vunpack.c.l.b16 %v1109
          %v1151 = vunpack.c.h.b16 %v1109
          %v1152 = vunpack.c.l.b16 %v1110
          %v1153 = vunpack.c.h.b16 %v1110
          %v1154 = vunpack.c.l.b16 %v1111
          %v1155 = vunpack.c.h.b16 %v1111
          %v1156 = vunpack.c.l.b16 %v1112
          %v1157 = vunpack.c.h.b16 %v1112
          %v1158 = vunpack.c.l.b16 %v1113
          %v1159 = vunpack.c.h.b16 %v1113
          %v1160 = vunpack.c.l.b16 %v1114
          %v1161 = vunpack.c.h.b16 %v1114
          %v1162 = vunpack.c.l.b16 %v1115
          %v1163 = vunpack.c.h.b16 %v1115
          %v1164 = vpack.c.b16 %v1132, %v1132
          %v1165 = vpack.c.b16 %v1133, %v1133
          %v1166 = vpack.c.b16 %v1134, %v1134
          %v1167 = vpack.c.b16 %v1135, %v1135
          %v1168 = vpack.c.b16 %v1136, %v1136
          %v1169 = vpack.c.b16 %v1137, %v1137
          %v1170 = vpack.c.b16 %v1138, %v1138
          %v1171 = vpack.c.b16 %v1139, %v1139
          %v1172 = vpack.c.b16 %v1140, %v1140
          %v1173 = vpack.c.b16 %v1141, %v1141
          %v1174 = vpack.c.b16 %v1142, %v1142
          %v1175 = vpack.c.b16 %v1143, %v1143
          %v1176 = vpack.c.b16 %v1144, %v1144
          %v1177 = vpack.c.b16 %v1145, %v1145
          %v1178 = vpack.c.b16 %v1146, %v1146
          %v1179 = vpack.c.b16 %v1147, %v1147
          %v1180 = vpack.c.b16 %v1148, %v1148
          %v1181 = vpack.c.b16 %v1149, %v1149
          %v1182 = vpack.c.b16 %v1150, %v1150
          %v1183 = vpack.c.b16 %v1151, %v1151
          %v1184 = vpack.c.b16 %v1152, %v1152
          %v1185 = vpack.c.b16 %v1153, %v1153
          %v1186 = vpack.c.b16 %v1154, %v1154
          %v1187 = vpack.c.b16 %v1155, %v1155
          %v1188 = vpack.c.b16 %v1156, %v1156
          %v1189 = vpack.c.b16 %v1157, %v1157
          %v1190 = vpack.c.b16 %v1158, %v1158
          %v1191 = vpack.c.b16 %v1159, %v1159
          %v1192 = vpack.c.b16 %v1160, %v1160
          %v1193 = vpack.c.b16 %v1161, %v1161
          %v1194 = vpack.c.b16 %v1162, %v1162
          %v1195 = vpack.c.b16 %v1163, %v1163
          %1228 = vst [vmem:[%s271] sm:$0xf] %v1164
          %1229 = vst [vmem:[%s271 + $0x4] sm:$0xf] %v1165
          %1230 = vst [vmem:[%s271 + $0x8] sm:$0xf] %v1166
          %1231 = vst [vmem:[%s271 + $0xc] sm:$0xf] %v1167
          %1232 = vst [vmem:[%s271 + $0x10] sm:$0xf] %v1168
          %1233 = vst [vmem:[%s271 + $0x14] sm:$0xf] %v1169
          %1234 = vst [vmem:[%s271 + $0x18] sm:$0xf] %v1170
          %1235 = vst [vmem:[%s271 + $0x1c] sm:$0xf] %v1171
          %1236 = vst [vmem:[%s271 + $0x20] sm:$0xf] %v1172
          %1237 = vst [vmem:[%s271 + $0x24] sm:$0xf] %v1173
          %1238 = vst [vmem:[%s271 + $0x28] sm:$0xf] %v1174
          %1239 = vst [vmem:[%s271 + $0x2c] sm:$0xf] %v1175
          %1240 = vst [vmem:[%s271 + $0x30] sm:$0xf] %v1176
          %1241 = vst [vmem:[%s271 + $0x34] sm:$0xf] %v1177
          %1242 = vst [vmem:[%s271 + $0x38] sm:$0xf] %v1178
          %1243 = vst [vmem:[%s271 + $0x3c] sm:$0xf] %v1179
          %1244 = vst [vmem:[%s271 + $0x40] sm:$0xf] %v1180
          %1245 = vst [vmem:[%s271 + $0x44] sm:$0xf] %v1181
          %1246 = vst [vmem:[%s271 + $0x48] sm:$0xf] %v1182
          %1247 = vst [vmem:[%s271 + $0x4c] sm:$0xf] %v1183
          %1248 = vst [vmem:[%s271 + $0x50] sm:$0xf] %v1184
          %1249 = vst [vmem:[%s271 + $0x54] sm:$0xf] %v1185
          %1250 = vst [vmem:[%s271 + $0x58] sm:$0xf] %v1186
          %1251 = vst [vmem:[%s271 + $0x5c] sm:$0xf] %v1187
          %1252 = vst [vmem:[%s271 + $0x60] sm:$0xf] %v1188
          %1253 = vst [vmem:[%s271 + $0x64] sm:$0xf] %v1189
          %1254 = vst [vmem:[%s271 + $0x68] sm:$0xf] %v1190
          %1255 = vst [vmem:[%s271 + $0x6c] sm:$0xf] %v1191
          %1256 = vst [vmem:[%s271 + $0x70] sm:$0xf] %v1192
          %1257 = vst [vmem:[%s271 + $0x74] sm:$0xf] %v1193
          %1258 = vst [vmem:[%s271 + $0x78] sm:$0xf] %v1194
          %1259 = vst [vmem:[%s271 + $0x7c] sm:$0xf] %v1195
        $region44: #{tpu_custom_call.1} parent=35 // pred_fallthru
          _
        %s1260 = sand.u32 %s155, 1
        %s1261 = scalar_lea.sflag [#allocation4], %s1260
        %s1262 = sand.u32 %s155, 1
        %s1263 = smul.addr %s1262, 128
        %s1264 = scalar_lea.vmem [#allocation3], %s1263
        // Predicated region
        $region45: #{tpu_custom_call.1} parent=35 // pred_check
          %p1265 = pneg %p165
        $region46: #{tpu_custom_call.1} parent=35 // pred_check_branch
          %1267 = sbr.rel (%p1265) target = $region48
        $region47: #{tpu_custom_call.1} parent=35 // pred_region
          %s1268 = smul.u32 32, %s23
          %s1270 = ssub.s32 2048, 2048
          %1271 = vsyncadd %s1261, %s1270
          %s1272 = sadd.s32 %s24, %s1268
          %s1273 = smul.addr %s1272, 64
          %s1274 = scalar_lea.hbm %s4, %s1273
          %s1275 = sshll.u32 %s1264, 4
          %s1276 = int_to_ptr.vmem [resolvable:$true] %s1275
          %1281 = dma.vmem_to_hbm [thread:$0]  %s1276, 2048, %s1274, %s1261, 64, 64, 4
        $region48: #{tpu_custom_call.1} parent=35 // pred_fallthru
          _
      $region36: #{tpu_custom_call.1} parent=5 // pred_fallthru
        _
      %p1282 = scmp.le.s32.totalorder 2, %s13
      // Predicated region
      $region49: #{tpu_custom_call.1} parent=5 // pred_check
        %p1283 = pneg %p1282
      $region50: #{tpu_custom_call.1} parent=5 // pred_check_branch
        %1285 = sbr.rel (%p1283) target = $region52
      $region51: #{tpu_custom_call.1} parent=5 // pred_region
        %s1286 = ssub.s32 %s13, 2
        // Predicated region
        $region53: #{tpu_custom_call.1} parent=51 // pred_check
          %p1287 = pneg %p171
        $region54: #{tpu_custom_call.1} parent=51 // pred_check_branch
          %1289 = sbr.rel (%p1287) target = $region56
        $region55: #{tpu_custom_call.1} parent=51 // pred_region
          %s1290 = sand.u32 %s156, 1
          %s1291 = scalar_lea.sflag [#allocation4], %s1290
          %s1292 = sand.u32 %s156, 1
          %s1293 = smul.addr %s1292, 128
          %s1294 = scalar_lea.vmem [#allocation3], %s1293
          %1295 = dma.done %s1291, 2048
        $region56: #{tpu_custom_call.1} parent=51 // pred_fallthru
          _
      $region52: #{tpu_custom_call.1} parent=5 // pred_fallthru
        _
    $region6: #{tpu_custom_call.1} parent=1 // loop_footer
      %s17 = sadd.s32 1, %s13
    $region7: #{tpu_custom_call.1} parent=1 // loop_footer_branch
      %12 = sbr.rel target = $region3
    $region8: #{tpu_custom_call.1} parent=1 // loop_exit
      _
    %1296 = vsyncpa [#allocation4], 1
    %s1297 = scalar_lea.sflag [#allocation4], 1
    %1298 = vsyncpa %s1297, 1

</llo_original>
